<compile_context>
chip_gen: v6e
topology: v6e:2x2x1
jax: 0.10.0
libtpu: 0.0.40
codegen_flags: <defaults>
</compile_context>

<pallas_src>
import functools

import jax
import jax.numpy as jnp
from jax.experimental import pallas as pl
from jax.experimental.pallas import tpu as pltpu

EPS = 1e-5
NEG_SLOPE = 0.1


def _round_up(v, m):
    return (v + m - 1) // m * m


# ---------------------------------------------------------------------------
# Pass 1: tiled matmul (bf16 x bf16 -> f32) + per-tile BN partial sums
# ---------------------------------------------------------------------------
def _matmul_stats_kernel(x_ref, w_ref, y_ref, sum_ref, ssq_ref):
    # x_ref: (tm, K) bf16, w_ref: (K, tn) bf16, y_ref: (tm, tn) f32
    # sum_ref / ssq_ref: (1, 8, tn) f32 per-channel partials
    # (replicated across the 8-sublane dim to keep a legal (8, lane) block).
    y = jnp.dot(x_ref[...], w_ref[...], preferred_element_type=jnp.float32)
    y_ref[...] = y
    s = jnp.sum(y, axis=0, keepdims=True)       # (1, tn)
    q = jnp.sum(y * y, axis=0, keepdims=True)   # (1, tn)
    sum_ref[...] = jnp.broadcast_to(s[None], sum_ref.shape)
    ssq_ref[...] = jnp.broadcast_to(q[None], ssq_ref.shape)


# ---------------------------------------------------------------------------
# Pass 2: BN as one FMA (precomputed scale/shift) + LeakyReLU(0.1)
# ---------------------------------------------------------------------------
def _bn_lrelu_kernel(y_ref, scale_ref, shift_ref, o_ref):
    z = y_ref[...] * scale_ref[...] + shift_ref[...]
    o_ref[...] = jnp.where(z > 0, z, NEG_SLOPE * z)


def _im2col_nhwc(x, ks, s, pad, dtype):
    """(N, Cin, H, W) -> (N*Ho*Wo, ks*ks*Cin) with feature order (ki, kj, c).

    Built channels-last so the trailing reshape is free (no HBM transpose of
    the expanded patches), and cast to bf16 up front to halve its traffic.
    """
    n, cin, h, w = x.shape
    ho = (h + 2 * pad - ks) // s + 1
    wo = (w + 2 * pad - ks) // s + 1
    xt = jnp.transpose(x.astype(dtype), (0, 2, 3, 1))            # NHWC
    xp = jnp.pad(xt, ((0, 0), (pad, pad), (pad, pad), (0, 0)))
    cols = [xp[:, ki:ki + s * ho:s, kj:kj + s * wo:s, :]
            for ki in range(ks) for kj in range(ks)]
    cols = jnp.concatenate(cols, axis=-1)                        # (N,Ho,Wo,ks*ks*Cin)
    return cols.reshape(n * ho * wo, ks * ks * cin), ho, wo


def _choose_cout_tile(cout):
    for t in (256, 128):
        if cout % t == 0:
            return t
    return cout  # whole channel dim as a single (legal) block


@functools.partial(jax.jit, static_argnames=("ks", "s", "pad", "m_tile"))
def conv_bn_relu_pallas(x, w, gamma, beta, *, ks, s, pad, m_tile=512):
    assert m_tile % 8 == 0
    n, cin, h, w_sp = x.shape
    cout = w.shape[0]
    k = ks * ks * cin

    # im2col (bf16, (ki, kj, c) feature order) and matching weight matrix.
    x_cols, ho, wo = _im2col_nhwc(x, ks, s, pad, jnp.bfloat16)   # (M, K)
    w_mat = jnp.transpose(w, (2, 3, 1, 0)).reshape(k, cout).astype(jnp.bfloat16)

    m = n * ho * wo
    tm = min(m_tile, _round_up(m, 8))
    mp = _round_up(m, tm)
    tn = _choose_cout_tile(cout)
    if mp != m:  # pad only M, with zero rows (exact zeros -> no stats bias)
        x_cols = jnp.pad(x_cols, ((0, mp - m), (0, 0)))
    mt = mp // tm
    nt = cout // tn

    flops1 = 2 * mp * k * cout
    bytes1 = mp * k * 2 + k * cout * 2 + mp * cout * 4 + 2 * mt * 8 * cout * 4
    y_raw, sum_part, ssq_part = pl.pallas_call(
        _matmul_stats_kernel,
        out_shape=(
            jax.ShapeDtypeStruct((mp, cout), jnp.float32),
            jax.ShapeDtypeStruct((mt, 8, cout), jnp.float32),
            jax.ShapeDtypeStruct((mt, 8, cout), jnp.float32),
        ),
        grid=(mt, nt),
        in_specs=[
            pl.BlockSpec((tm, k), lambda i, j: (i, 0)),
            pl.BlockSpec((k, tn), lambda i, j: (0, j)),
        ],
        out_specs=(
            pl.BlockSpec((tm, tn), lambda i, j: (i, j)),
            pl.BlockSpec((1, 8, tn), lambda i, j: (i, 0, j)),
            pl.BlockSpec((1, 8, tn), lambda i, j: (i, 0, j)),
        ),
        compiler_params=pltpu.CompilerParams(
            dimension_semantics=("parallel", "parallel")),
        cost_estimate=pl.CostEstimate(
            flops=flops1, transcendentals=0, bytes_accessed=bytes1),
    )(x_cols, w_mat)

    # BN stats over the TRUE row count (padded rows contribute exact zeros).
    m_true = jnp.float32(m)
    sums = jnp.sum(sum_part[:, 0, :], axis=0)
    ssqs = jnp.sum(ssq_part[:, 0, :], axis=0)
    mean = sums / m_true
    var = jnp.maximum(ssqs / m_true - mean * mean, 0.0)     # biased var (train)
    scale = gamma.astype(jnp.float32) * jax.lax.rsqrt(var + EPS)
    shift = beta.astype(jnp.float32) - mean * scale
    scale2 = scale.reshape(1, cout)
    shift2 = shift.reshape(1, cout)

    flops2 = 3 * mp * cout
    bytes2 = 2 * mp * cout * 4 + 2 * cout * 4
    z = pl.pallas_call(
        _bn_lrelu_kernel,
        out_shape=jax.ShapeDtypeStruct((mp, cout), jnp.float32),
        grid=(mt, nt),
        in_specs=[
            pl.BlockSpec((tm, tn), lambda i, j: (i, j)),
            pl.BlockSpec((1, tn), lambda i, j: (0, j)),
            pl.BlockSpec((1, tn), lambda i, j: (0, j)),
        ],
        out_specs=pl.BlockSpec((tm, tn), lambda i, j: (i, j)),
        input_output_aliases={0: 0},   # reuse the conv-output HBM buffer
        compiler_params=pltpu.CompilerParams(
            dimension_semantics=("parallel", "parallel")),
        cost_estimate=pl.CostEstimate(
            flops=flops2, transcendentals=0, bytes_accessed=bytes2),
    )(y_raw, scale2, shift2)

    # (M, Cout) -> (N, Ho, Wo, Cout) -> NCHW (PyTorch module's layout).
    return z[:m].reshape(n, ho, wo, cout).transpose(0, 3, 1, 2)


def _reference(x, w, gamma, beta, ks, s, pad, compute_dtype=jnp.float32):
    """Plain-JAX reference: conv2d (no bias) + BN (batch stats) + LeakyReLU."""
    y = jax.lax.conv_general_dilated(
        x.astype(compute_dtype), w.astype(compute_dtype),
        window_strides=(s, s), padding=[(pad, pad), (pad, pad)],
        dimension_numbers=("NCHW", "OIHW", "NCHW"),
        preferred_element_type=jnp.float32)
    mean = jnp.mean(y, axis=(0, 2, 3), keepdims=True)
    var = jnp.mean((y - mean) ** 2, axis=(0, 2, 3), keepdims=True)
    y_hat = (y - mean) * jax.lax.rsqrt(var + EPS)
    z = y_hat * gamma[None, :, None, None] + beta[None, :, None, None]
    return jnp.where(z > 0, z, NEG_SLOPE * z)


if __name__ == "__main__":
    # conv_bn_relu(nin=4, nout=8, ks=3, s=1, pad='SAME') -> padding = 1
    N, CIN, H, W = 2, 4, 16, 16
    COUT, KS, S = 8, 3, 1
    PAD = (KS - 1) // 2  # 'SAME'

    key = jax.random.PRNGKey(0)
    kx, kw, kg, kb = jax.random.split(key, 4)
    x = jax.random.normal(kx, (N, CIN, H, W), jnp.float32)
    conv_w = jax.random.normal(kw, (COUT, CIN, KS, KS), jnp.float32) * 0.1
    bn_gamma = 1.0 + 0.1 * jax.random.normal(kg, (COUT,), jnp.float32)
    bn_beta = 0.1 * jax.random.normal(kb, (COUT,), jnp.float32)

    # m_tile=192 so M=512 does not divide the tile -> exercises the padded-M
    # path (BN stats must still be exact) and a multi-step grid.
    out = conv_bn_relu_pallas(x, conv_w, bn_gamma, bn_beta,
                              ks=KS, s=S, pad=PAD, m_tile=192)
    out = jax.block_until_ready(out)
    assert out.shape == (N, COUT, H, W), out.shape

    # Tight check vs a reference that mirrors the kernel's bf16 matmul
    # operands (f32 accumulation); loose sanity check vs a pure-f32 reference.
    ref_bf16 = _reference(x, conv_w, bn_gamma, bn_beta, KS, S, PAD,
                          compute_dtype=jnp.bfloat16)
    ref_f32 = _reference(x, conv_w, bn_gamma, bn_beta, KS, S, PAD)
    err_bf16 = float(jnp.max(jnp.abs(out - ref_bf16)))
    err_f32 = float(jnp.max(jnp.abs(out - ref_f32)))
    assert err_bf16 < 2e-3, err_bf16
    assert err_f32 < 5e-2, err_f32

    print("KERNEL_OK")
</pallas_src>

<mosaic_0001>
module attributes {stable_mosaic.version = 11 : i64} {
  func.func @_matmul_stats_kernel(%arg0: i32, %arg1: i32, %arg2: memref<192x36xbf16, #tpu.memory_space<vmem>>, %arg3: memref<36x8xbf16, #tpu.memory_space<vmem>>, %arg4: memref<192x8xf32, #tpu.memory_space<vmem>>, %arg5: memref<1x8x8xf32, #tpu.memory_space<vmem>>, %arg6: memref<1x8x8xf32, #tpu.memory_space<vmem>>) attributes {dimension_semantics = [#tpu.dimension_semantics<parallel>, #tpu.dimension_semantics<parallel>], iteration_bounds = array<i64: 3, 1>, scalar_prefetch = 0 : i64, scratch_operands = 0 : i64, tpu.core_type = #tpu.core_type<tc>, window_params = [{transform_indices = @transform_0, window_bounds = array<i64: 192, 36>}, {transform_indices = @transform_1, window_bounds = array<i64: 36, 8>}, {transform_indices = @transform_2, window_bounds = array<i64: 192, 8>}, {transform_indices = @transform_3, window_bounds = array<i64: 1, 8, 8>}, {transform_indices = @transform_4, window_bounds = array<i64: 1, 8, 8>}]} {
    %c0 = arith.constant 0 : index
    %c0_0 = arith.constant 0 : index
    %0 = vector.load %arg2[%c0, %c0_0] : memref<192x36xbf16, #tpu.memory_space<vmem>>, vector<192x36xbf16>
    %c0_1 = arith.constant 0 : index
    %c0_2 = arith.constant 0 : index
    %1 = vector.load %arg3[%c0_1, %c0_2] : memref<36x8xbf16, #tpu.memory_space<vmem>>, vector<36x8xbf16>
    %cst = arith.constant dense<0.000000e+00> : vector<192x8xf32>
    %2 = tpu.matmul %0, %1, %cst {dimension_numbers = #tpu.dot_dimension_numbers<[1], [0], [0], [1], [0, 0, 1, 1], [], []>} : vector<192x36xbf16>, vector<36x8xbf16>, vector<192x8xf32> -> vector<192x8xf32>
    %c0_3 = arith.constant 0 : index
    %c0_4 = arith.constant 0 : index
    %3 = vector.load %arg4[%c0_3, %c0_4] : memref<192x8xf32, #tpu.memory_space<vmem>>, vector<192x8xf32>
    tpu.vector_store %arg4[%c0_3, %c0_4], %2 {strides = array<i32>} : memref<192x8xf32, #tpu.memory_space<vmem>>, vector<192x8xf32>,
    %cst_5 = arith.constant dense<0.000000e+00> : vector<8xf32>
    %4 = vector.multi_reduction <add>, %2, %cst_5 [0] : vector<192x8xf32> to vector<8xf32>
    %5 = vector.shape_cast %4 : vector<8xf32> to vector<1x8xf32>
    %6 = arith.mulf %2, %2 : vector<192x8xf32>
    %cst_6 = arith.constant dense<0.000000e+00> : vector<8xf32>
    %7 = vector.multi_reduction <add>, %6, %cst_6 [0] : vector<192x8xf32> to vector<8xf32>
    %8 = vector.shape_cast %7 : vector<8xf32> to vector<1x8xf32>
    %9 = vector.shape_cast %5 : vector<1x8xf32> to vector<1x1x8xf32>
    %10 = vector.shape_cast %9 : vector<1x1x8xf32> to vector<1x1x8xf32>
    %11 = vector.broadcast %10 : vector<1x1x8xf32> to vector<1x8x8xf32>
    %c0_7 = arith.constant 0 : index
    %c0_8 = arith.constant 0 : index
    %c0_9 = arith.constant 0 : index
    %12 = vector.load %arg5[%c0_7, %c0_8, %c0_9] : memref<1x8x8xf32, #tpu.memory_space<vmem>>, vector<1x8x8xf32>
    tpu.vector_store %arg5[%c0_7, %c0_8, %c0_9], %11 {strides = array<i32>} : memref<1x8x8xf32, #tpu.memory_space<vmem>>, vector<1x8x8xf32>,
    %13 = vector.shape_cast %8 : vector<1x8xf32> to vector<1x1x8xf32>
    %14 = vector.shape_cast %13 : vector<1x1x8xf32> to vector<1x1x8xf32>
    %15 = vector.broadcast %14 : vector<1x1x8xf32> to vector<1x8x8xf32>
    %c0_10 = arith.constant 0 : index
    %c0_11 = arith.constant 0 : index
    %c0_12 = arith.constant 0 : index
    %16 = vector.load %arg6[%c0_10, %c0_11, %c0_12] : memref<1x8x8xf32, #tpu.memory_space<vmem>>, vector<1x8x8xf32>
    tpu.vector_store %arg6[%c0_10, %c0_11, %c0_12], %15 {strides = array<i32>} : memref<1x8x8xf32, #tpu.memory_space<vmem>>, vector<1x8x8xf32>,
    return
  }
  func.func @transform_0(%arg0: i32, %arg1: i32) -> (i32, i32) {
    %c0_i32 = arith.constant 0 : i32
    %c0_i32_0 = arith.constant 0 : i32
    return %arg0, %c0_i32 : i32, i32
  }
  func.func @transform_1(%arg0: i32, %arg1: i32) -> (i32, i32) {
    %c0_i32 = arith.constant 0 : i32
    %c0_i32_0 = arith.constant 0 : i32
    return %c0_i32, %arg1 : i32, i32
  }
  func.func @transform_2(%arg0: i32, %arg1: i32) -> (i32, i32) {
    %c0_i32 = arith.constant 0 : i32
    return %arg0, %arg1 : i32, i32
  }
  func.func @transform_3(%arg0: i32, %arg1: i32) -> (i32, i32, i32) {
    %c0_i32 = arith.constant 0 : i32
    %c0_i32_0 = arith.constant 0 : i32
    return %arg0, %c0_i32, %arg1 : i32, i32, i32
  }
  func.func @transform_4(%arg0: i32, %arg1: i32) -> (i32, i32, i32) {
    %c0_i32 = arith.constant 0 : i32
    %c0_i32_0 = arith.constant 0 : i32
    return %arg0, %c0_i32, %arg1 : i32, i32, i32
  }
}

module attributes {stable_mosaic.version = 11 : i64} {
  func.func @_bn_lrelu_kernel(%arg0: i32, %arg1: i32, %arg2: memref<192x8xf32, #tpu.memory_space<vmem>>, %arg3: memref<1x8xf32, #tpu.memory_space<vmem>>, %arg4: memref<1x8xf32, #tpu.memory_space<vmem>>, %arg5: memref<192x8xf32, #tpu.memory_space<vmem>>) attributes {dimension_semantics = [#tpu.dimension_semantics<parallel>, #tpu.dimension_semantics<parallel>], iteration_bounds = array<i64: 3, 1>, scalar_prefetch = 0 : i64, scratch_operands = 0 : i64, tpu.core_type = #tpu.core_type<tc>, window_params = [{transform_indices = @transform_0, window_bounds = array<i64: 192, 8>}, {transform_indices = @transform_1, window_bounds = array<i64: 1, 8>}, {transform_indices = @transform_2, window_bounds = array<i64: 1, 8>}, {transform_indices = @transform_3, window_bounds = array<i64: 192, 8>}]} {
    %c0 = arith.constant 0 : index
    %c0_0 = arith.constant 0 : index
    %0 = vector.load %arg2[%c0, %c0_0] : memref<192x8xf32, #tpu.memory_space<vmem>>, vector<192x8xf32>
    %c0_1 = arith.constant 0 : index
    %c0_2 = arith.constant 0 : index
    %1 = vector.load %arg3[%c0_1, %c0_2] : memref<1x8xf32, #tpu.memory_space<vmem>>, vector<1x8xf32>
    %2 = vector.broadcast %1 : vector<1x8xf32> to vector<192x8xf32>
    %3 = arith.mulf %0, %2 : vector<192x8xf32>
    %c0_3 = arith.constant 0 : index
    %c0_4 = arith.constant 0 : index
    %4 = vector.load %arg4[%c0_3, %c0_4] : memref<1x8xf32, #tpu.memory_space<vmem>>, vector<1x8xf32>
    %5 = vector.broadcast %4 : vector<1x8xf32> to vector<192x8xf32>
    %6 = arith.addf %3, %5 : vector<192x8xf32>
    %cst = arith.constant 0.000000e+00 : f32
    %7 = vector.broadcast %cst : f32 to vector<192x8xf32>
    %8 = arith.cmpf ogt, %6, %7 : vector<192x8xf32>
    %cst_5 = arith.constant 1.000000e-01 : f32
    %9 = vector.broadcast %cst_5 : f32 to vector<192x8xf32>
    %10 = arith.mulf %9, %6 : vector<192x8xf32>
    %11 = arith.select %8, %6, %10 : vector<192x8xi1>, vector<192x8xf32>
    %c0_6 = arith.constant 0 : index
    %c0_7 = arith.constant 0 : index
    %12 = vector.load %arg5[%c0_6, %c0_7] : memref<192x8xf32, #tpu.memory_space<vmem>>, vector<192x8xf32>
    tpu.vector_store %arg5[%c0_6, %c0_7], %11 {strides = array<i32>} : memref<192x8xf32, #tpu.memory_space<vmem>>, vector<192x8xf32>,
    return
  }
  func.func @transform_0(%arg0: i32, %arg1: i32) -> (i32, i32) {
    %c0_i32 = arith.constant 0 : i32
    return %arg0, %arg1 : i32, i32
  }
  func.func @transform_1(%arg0: i32, %arg1: i32) -> (i32, i32) {
    %c0_i32 = arith.constant 0 : i32
    %c0_i32_0 = arith.constant 0 : i32
    return %c0_i32, %arg1 : i32, i32
  }
  func.func @transform_2(%arg0: i32, %arg1: i32) -> (i32, i32) {
    %c0_i32 = arith.constant 0 : i32
    %c0_i32_0 = arith.constant 0 : i32
    return %c0_i32, %arg1 : i32, i32
  }
  func.func @transform_3(%arg0: i32, %arg1: i32) -> (i32, i32) {
    %c0_i32 = arith.constant 0 : i32
    return %arg0, %arg1 : i32, i32
  }
}

</mosaic_0001>

<llo_original>
// kernel: conv_bn_relu_pallas.3
$region0: #{conv_bn_relu_pallas.3}
  #allocation0 [shape = 'u32[]', space=smem, size = 0x4, offset = 0x4, fixed_abs, tag = 'smem constant byte address 0x4 - core index']
  #allocation1 [shape = 'u32[144,128]{1,0:T(1,128)}', space=vmem, size = 0x12000, scoped, tag = 'internal scratch']
  %s0 = inlined_call_operand.vmem [shape: f32[576,8], index: 0, kind: input, shape index: {}, may-alias: {0,3}]
  %s1 = inlined_call_operand.vmem [shape: f32[1,8], index: 1, kind: input, shape index: {}]
  %s2 = inlined_call_operand.vmem [shape: f32[1,8], index: 2, kind: input, shape index: {}]
  %s3 = inlined_call_operand.vmem [shape: f32[576,8], index: 3, kind: output, shape index: {}, may-alias: {0,3}]
  %s4 = sld [smem:[#allocation0]]
  $region45: #{conv_bn_relu_pallas.3} parent=0
    _
  %s6 = ssub.s32 1, %s4
  %s7 = scalar_select 0, %s6, %s4
  loop: start=0, step=1, limit=5
  $region2: #{conv_bn_relu_pallas.3} parent=0 // loop_pre_header
    _
  $region3: #{conv_bn_relu_pallas.3} parent=0 // loop_header
    %s9 = sphi 0, %s13
    %p10 = scmp.ge.s32.totalorder %s9, 5
    %s16 = sphi 0, %s28
    %s17 = sphi 0, %s24
    %s18 = sphi 0, %s16
    %s19 = sphi 0, %s17
    %s20 = sphi 0, %s18
    %s21 = sphi 0, %s19
    %s33 = sphi 0, %s35
    %s36 = sphi 0, %s33
    %s37 = sphi 0, %s36
    %s53 = sphi 0, %s37
    %s59 = sphi 0, %s61
    %s62 = sphi 0, %s59
    %s63 = sphi 0, %s62
    %s79 = sphi 0, %s63
    %s85 = sphi 0, %s87
    %s88 = sphi 0, %s85
    %s89 = sphi 0, %s88
    %s105 = sphi 0, %s89
    %s113 = sphi 0, %s115
    %s116 = sphi 0, %s113
    %s117 = sphi 0, %s116
    %s133 = sphi 0, %s117
  $region4: #{conv_bn_relu_pallas.3} parent=0 // loop_header_branch
    %12 = sbr.rel (%p10) target = $region8
  $region5: #{conv_bn_relu_pallas.3} parent=0 // loop_body
    %s14 = ssub.s32 %s9, 1
    %s15 = ssub.s32 %s9, 2
    %s22 = sadd.s32 1, %s17
    %p23 = scmp.ge.s32.totalorder %s22, 1
    %s24 = scalar_select %p23, 0, %s22
    %s25 = sadd.s32 1, %s16
    %s26 = scalar_select %p23, %s25, %s16
    %p27 = scmp.ge.s32.totalorder %s26, 3
    %s28 = scalar_select %p27, 0, %s26
    %s29 = ssub.s32 %s16, %s28
    %s30 = ssub.s32 %s17, %s24
    %s31 = sor.u32 %s29, %s30
    %p32 = scmp.eq.s32.totalorder %s31, 0
    %s34 = sadd.s32 %s33, 1
    %s35 = scalar_select %p32, %s33, %s34
    %p38 = pneg %p32
    %p39 = scmp.eq.s32.totalorder %s9, 2
    %p40 = por %p38, %p39
    %p41 = scmp.ne.s32.totalorder %s33, %s36
    %p42 = scmp.eq.s32.totalorder %s9, 0
    %p43 = por %p41, %p42
    %p44 = scmp.ne.s32.totalorder %s33, %s36
    %p45 = scmp.eq.s32.totalorder %s14, 2
    %p46 = por %p44, %p45
    %p47 = scmp.ne.s32.totalorder %s36, %s37
    %p48 = scmp.eq.s32.totalorder %s14, 0
    %p49 = por %p47, %p48
    %p50 = scmp.ne.s32.totalorder %s36, %s37
    %p51 = scmp.eq.s32.totalorder %s15, 2
    %p52 = por %p50, %p51
    %p54 = scmp.ne.s32.totalorder %s37, %s53
    %p55 = scmp.eq.s32.totalorder %s15, 0
    %p56 = por %p54, %p55
    %s57 = ssub.s32 %s17, %s24
    %p58 = scmp.eq.s32.totalorder %s57, 0
    %s60 = sadd.s32 %s59, 1
    %s61 = scalar_select %p58, %s59, %s60
    %p64 = pneg %p58
    %p65 = scmp.eq.s32.totalorder %s9, 2
    %p66 = por %p64, %p65
    %p67 = scmp.ne.s32.totalorder %s59, %s62
    %p68 = scmp.eq.s32.totalorder %s9, 0
    %p69 = por %p67, %p68
    %p70 = scmp.ne.s32.totalorder %s59, %s62
    %p71 = scmp.eq.s32.totalorder %s14, 2
    %p72 = por %p70, %p71
    %p73 = scmp.ne.s32.totalorder %s62, %s63
    %p74 = scmp.eq.s32.totalorder %s14, 0
    %p75 = por %p73, %p74
    %p76 = scmp.ne.s32.totalorder %s62, %s63
    %p77 = scmp.eq.s32.totalorder %s15, 2
    %p78 = por %p76, %p77
    %p80 = scmp.ne.s32.totalorder %s63, %s79
    %p81 = scmp.eq.s32.totalorder %s15, 0
    %p82 = por %p80, %p81
    %s83 = ssub.s32 %s17, %s24
    %p84 = scmp.eq.s32.totalorder %s83, 0
    %s86 = sadd.s32 %s85, 1
    %s87 = scalar_select %p84, %s85, %s86
    %p90 = pneg %p84
    %p91 = scmp.eq.s32.totalorder %s9, 2
    %p92 = por %p90, %p91
    %p93 = scmp.ne.s32.totalorder %s85, %s88
    %p94 = scmp.eq.s32.totalorder %s9, 0
    %p95 = por %p93, %p94
    %p96 = scmp.ne.s32.totalorder %s85, %s88
    %p97 = scmp.eq.s32.totalorder %s14, 2
    %p98 = por %p96, %p97
    %p99 = scmp.ne.s32.totalorder %s88, %s89
    %p100 = scmp.eq.s32.totalorder %s14, 0
    %p101 = por %p99, %p100
    %p102 = scmp.ne.s32.totalorder %s88, %s89
    %p103 = scmp.eq.s32.totalorder %s15, 2
    %p104 = por %p102, %p103
    %p106 = scmp.ne.s32.totalorder %s89, %s105
    %p107 = scmp.eq.s32.totalorder %s15, 0
    %p108 = por %p106, %p107
    %s109 = ssub.s32 %s16, %s28
    %s110 = ssub.s32 %s17, %s24
    %s111 = sor.u32 %s109, %s110
    %p112 = scmp.eq.s32.totalorder %s111, 0
    %s114 = sadd.s32 %s113, 1
    %s115 = scalar_select %p112, %s113, %s114
    %p118 = pneg %p112
    %p119 = scmp.eq.s32.totalorder %s9, 2
    %p120 = por %p118, %p119
    %p121 = scmp.ne.s32.totalorder %s113, %s116
    %p122 = scmp.eq.s32.totalorder %s9, 0
    %p123 = por %p121, %p122
    %p124 = scmp.ne.s32.totalorder %s113, %s116
    %p125 = scmp.eq.s32.totalorder %s14, 2
    %p126 = por %p124, %p125
    %p127 = scmp.ne.s32.totalorder %s116, %s117
    %p128 = scmp.eq.s32.totalorder %s14, 0
    %p129 = por %p127, %p128
    %p130 = scmp.ne.s32.totalorder %s116, %s117
    %p131 = scmp.eq.s32.totalorder %s15, 2
    %p132 = por %p130, %p131
    %p134 = scmp.ne.s32.totalorder %s117, %s133
    %p135 = scmp.eq.s32.totalorder %s15, 0
    %p136 = por %p134, %p135
    %p137 = scmp.le.s32.totalorder 1, %s9
    %p138 = scmp.lt.s32.totalorder %s9, 4
    %p139 = pnand %p137, %p138
    %p140 = pneg %p139
    // Predicated region
    $region9: #{conv_bn_relu_pallas.3} parent=5 // pred_check
      _
    $region10: #{conv_bn_relu_pallas.3} parent=5 // pred_check_branch
      %142 = sbr.rel (%p139) target = $region12
    $region11: #{conv_bn_relu_pallas.3} parent=5 // pred_region
      %s143 = ssub.s32 %s9, 1
      // Predicated region
      $region13: #{conv_bn_relu_pallas.3} parent=11 // pred_check
        %p144 = pneg %p75
      $region14: #{conv_bn_relu_pallas.3} parent=11 // pred_check_branch
        %146 = sbr.rel (%p144) target = $region16
      $region15: #{conv_bn_relu_pallas.3} parent=11 // pred_region
        %p147 = scmp.lt.s32.totalorder %s19, 0
        %s148 = scalar_select %p147, %s19, 0
        %s149 = scalar_lea.vmem %s1, %s148
      $region16: #{conv_bn_relu_pallas.3} parent=11 // pred_fallthru
        _
      // Predicated region
      $region17: #{conv_bn_relu_pallas.3} parent=11 // pred_check
        %p150 = pneg %p101
      $region18: #{conv_bn_relu_pallas.3} parent=11 // pred_check_branch
        %152 = sbr.rel (%p150) target = $region20
      $region19: #{conv_bn_relu_pallas.3} parent=11 // pred_region
        %p153 = scmp.lt.s32.totalorder %s19, 0
        %s154 = scalar_select %p153, %s19, 0
        %s155 = scalar_lea.vmem %s2, %s154
      $region20: #{conv_bn_relu_pallas.3} parent=11 // pred_fallthru
        _
    $region12: #{conv_bn_relu_pallas.3} parent=5 // pred_fallthru
      _
    %p156 = scmp.lt.s32.totalorder %s9, 3
    // Predicated region
    $region21: #{conv_bn_relu_pallas.3} parent=5 // pred_check
      %p157 = pneg %p156
    $region22: #{conv_bn_relu_pallas.3} parent=5 // pred_check_branch
      %159 = sbr.rel (%p157) target = $region24
    $region23: #{conv_bn_relu_pallas.3} parent=5 // pred_region
      // Predicated region
      $region25: #{conv_bn_relu_pallas.3} parent=23 // pred_check
        %p160 = pneg %p43
      $region26: #{conv_bn_relu_pallas.3} parent=23 // pred_check_branch
        %162 = sbr.rel (%p160) target = $region28
      $region27: #{conv_bn_relu_pallas.3} parent=23 // pred_region
        %s163 = smul.u32 24, %s16
        %p164 = scmp.lt.s32.totalorder %s163, 71
        %s165 = scalar_select %p164, %s163, 71
        %p166 = scmp.lt.s32.totalorder %s17, 0
        %s167 = scalar_select %p166, %s17, 0
        %s168 = sadd.s32 %s167, %s165
        %s169 = smul.addr %s168, 8
        %s170 = scalar_lea.vmem %s0, %s169
        %s171 = smul.u32 24, %s16
      $region28: #{conv_bn_relu_pallas.3} parent=23 // pred_fallthru
        _
    $region24: #{conv_bn_relu_pallas.3} parent=5 // pred_fallthru
      _
    %p172 = scmp.le.s32.totalorder 1, %s9
    %p173 = scmp.lt.s32.totalorder %s9, 4
    %p174 = pnand %p172, %p173
    %p175 = pneg %p174
    // Predicated region
    $region29: #{conv_bn_relu_pallas.3} parent=5 // pred_check
      _
    $region30: #{conv_bn_relu_pallas.3} parent=5 // pred_check_branch
      %177 = sbr.rel (%p174) target = $region32
    $region31: #{conv_bn_relu_pallas.3} parent=5 // pred_region
      %s178 = ssub.s32 %s9, 1
      %s179 = smul.u32 24, %s18
      %p180 = scmp.lt.s32.totalorder %s179, 71
      %s181 = scalar_select %p180, %s179, 71
      %p182 = scmp.lt.s32.totalorder %s19, 0
      %s183 = scalar_select %p182, %s19, 0
      %s184 = sadd.s32 %s183, %s181
      %s185 = smul.addr %s184, 8
      %s186 = scalar_lea.vmem %s0, %s185
      %p187 = pneg %p49
      %p188 = pneg %p46
      %p189 = scmp.lt.s32.totalorder %s19, 0
      %s190 = scalar_select %p189, %s19, 0
      %s191 = scalar_lea.vmem %s1, %s190
      %p192 = pneg %p75
      %p193 = pneg %p72
      %p194 = scmp.lt.s32.totalorder %s19, 0
      %s195 = scalar_select %p194, %s19, 0
      %s196 = scalar_lea.vmem %s2, %s195
      %p197 = pneg %p101
      %p198 = pneg %p98
      %p199 = pneg %p129
      %p200 = pneg %p126
      %s201 = smul.u32 24, %s18
      %p202 = scmp.lt.s32.totalorder %s201, 71
      %s203 = scalar_select %p202, %s201, 71
      %p204 = scmp.lt.s32.totalorder %s19, 0
      %s205 = scalar_select %p204, %s19, 0
      %s206 = sadd.s32 %s205, %s203
      %s207 = smul.addr %s206, 8
      %s208 = scalar_lea.vmem %s3, %s207
      %s209 = smul.u32 24, %s18
      %p210 = scmp.lt.s32.totalorder %s209, 71
      %s211 = scalar_select %p210, %s209, 71
      %p212 = scmp.lt.s32.totalorder %s19, 0
      %s213 = scalar_select %p212, %s19, 0
      %s214 = sadd.s32 %s213, %s211
      %s215 = smul.addr %s214, 8
      %s216 = scalar_lea.vmem %s0, %s215
      %s217 = smul.u32 24, %s18
      %p218 = scmp.lt.s32.totalorder %s19, 0
      %s219 = scalar_select %p218, %s19, 0
      %s220 = scalar_lea.vmem %s1, %s219
      %p221 = scmp.lt.s32.totalorder %s19, 0
      %s222 = scalar_select %p221, %s19, 0
      %s223 = scalar_lea.vmem %s2, %s222
      %s224 = smul.u32 24, %s18
      %p225 = scmp.lt.s32.totalorder %s224, 71
      %s226 = scalar_select %p225, %s224, 71
      %p227 = scmp.lt.s32.totalorder %s19, 0
      %s228 = scalar_select %p227, %s19, 0
      %s229 = sadd.s32 %s228, %s226
      %s230 = smul.addr %s229, 8
      %s231 = scalar_lea.vmem %s3, %s230
      %s232 = smul.u32 24, %s18
      %v233 = vld [vmem:[%s216] sm:$0xff]
      %v234 = vld [vmem:[%s216 + $0x8] sm:$0xff]
      %v235 = vld [vmem:[%s216 + $0x10] sm:$0xff]
      %v236 = vld [vmem:[%s216 + $0x18] sm:$0xff]
      %v237 = vld [vmem:[%s216 + $0x20] sm:$0xff]
      %v238 = vld [vmem:[%s216 + $0x28] sm:$0xff]
      %v239 = vld [vmem:[%s216 + $0x30] sm:$0xff]
      %v240 = vld [vmem:[%s216 + $0x38] sm:$0xff]
      %v241 = vld [vmem:[%s216 + $0x40] sm:$0xff]
      %v242 = vld [vmem:[%s216 + $0x48] sm:$0xff]
      %v243 = vld [vmem:[%s216 + $0x50] sm:$0xff]
      %v244 = vld [vmem:[%s216 + $0x58] sm:$0xff]
      %v245 = vld [vmem:[%s216 + $0x60] sm:$0xff]
      %v246 = vld [vmem:[%s216 + $0x68] sm:$0xff]
      %v247 = vld [vmem:[%s216 + $0x70] sm:$0xff]
      %v248 = vld [vmem:[%s216 + $0x78] sm:$0xff]
      %v249 = vld [vmem:[%s216 + $0x80] sm:$0xff]
      %v250 = vld [vmem:[%s216 + $0x88] sm:$0xff]
      %v251 = vld [vmem:[%s216 + $0x90] sm:$0xff]
      %v252 = vld [vmem:[%s216 + $0x98] sm:$0xff]
      %v253 = vld [vmem:[%s216 + $0xa0] sm:$0xff]
      %v254 = vld [vmem:[%s216 + $0xa8] sm:$0xff]
      %v255 = vld [vmem:[%s216 + $0xb0] sm:$0xff]
      %v256 = vld [vmem:[%s216 + $0xb8] sm:$0xff]
      %v257 = vld [vmem:[%s220] sm:$0x1]
      %v259 = vlaneseq
      %v260 = vshrl.u32 %v259, 7
      %v261 = vsub.s32 0, %v260
      %v262 = vrot.slane %v257, %v261
      %v264 = vmul.f32 %v233, %v262
      %v265 = vmul.f32 %v234, %v262
      %v266 = vmul.f32 %v235, %v262
      %v267 = vmul.f32 %v236, %v262
      %v268 = vmul.f32 %v237, %v262
      %v269 = vmul.f32 %v238, %v262
      %v270 = vmul.f32 %v239, %v262
      %v271 = vmul.f32 %v240, %v262
      %v272 = vmul.f32 %v241, %v262
      %v273 = vmul.f32 %v242, %v262
      %v274 = vmul.f32 %v243, %v262
      %v275 = vmul.f32 %v244, %v262
      %v276 = vmul.f32 %v245, %v262
      %v277 = vmul.f32 %v246, %v262
      %v278 = vmul.f32 %v247, %v262
      %v279 = vmul.f32 %v248, %v262
      %v280 = vmul.f32 %v249, %v262
      %v281 = vmul.f32 %v250, %v262
      %v282 = vmul.f32 %v251, %v262
      %v283 = vmul.f32 %v252, %v262
      %v284 = vmul.f32 %v253, %v262
      %v285 = vmul.f32 %v254, %v262
      %v286 = vmul.f32 %v255, %v262
      %v287 = vmul.f32 %v256, %v262
      %v288 = vld [vmem:[%s223] sm:$0x1]
      %v290 = vlaneseq
      %v291 = vshrl.u32 %v290, 7
      %v292 = vsub.s32 0, %v291
      %v293 = vrot.slane %v288, %v292
      %v295 = vadd.f32 %v264, %v293
      %v296 = vadd.f32 %v265, %v293
      %v297 = vadd.f32 %v266, %v293
      %v298 = vadd.f32 %v267, %v293
      %v299 = vadd.f32 %v268, %v293
      %v300 = vadd.f32 %v269, %v293
      %v301 = vadd.f32 %v270, %v293
      %v302 = vadd.f32 %v271, %v293
      %v303 = vadd.f32 %v272, %v293
      %v304 = vadd.f32 %v273, %v293
      %v305 = vadd.f32 %v274, %v293
      %v306 = vadd.f32 %v275, %v293
      %v307 = vadd.f32 %v276, %v293
      %v308 = vadd.f32 %v277, %v293
      %v309 = vadd.f32 %v278, %v293
      %v310 = vadd.f32 %v279, %v293
      %v311 = vadd.f32 %v280, %v293
      %v312 = vadd.f32 %v281, %v293
      %v313 = vadd.f32 %v282, %v293
      %v314 = vadd.f32 %v283, %v293
      %v315 = vadd.f32 %v284, %v293
      %v316 = vadd.f32 %v285, %v293
      %v317 = vadd.f32 %v286, %v293
      %v318 = vadd.f32 %v287, %v293
      %vm319 = vcmp.gt.f32.partialorder %v295, 0.0
      %vm320 = vcmp.gt.f32.partialorder %v296, 0.0
      %vm321 = vcmp.gt.f32.partialorder %v297, 0.0
      %vm322 = vcmp.gt.f32.partialorder %v298, 0.0
      %vm323 = vcmp.gt.f32.partialorder %v299, 0.0
      %vm324 = vcmp.gt.f32.partialorder %v300, 0.0
      %vm325 = vcmp.gt.f32.partialorder %v301, 0.0
      %vm326 = vcmp.gt.f32.partialorder %v302, 0.0
      %vm327 = vcmp.gt.f32.partialorder %v303, 0.0
      %vm328 = vcmp.gt.f32.partialorder %v304, 0.0
      %vm329 = vcmp.gt.f32.partialorder %v305, 0.0
      %vm330 = vcmp.gt.f32.partialorder %v306, 0.0
      %vm331 = vcmp.gt.f32.partialorder %v307, 0.0
      %vm332 = vcmp.gt.f32.partialorder %v308, 0.0
      %vm333 = vcmp.gt.f32.partialorder %v309, 0.0
      %vm334 = vcmp.gt.f32.partialorder %v310, 0.0
      %vm335 = vcmp.gt.f32.partialorder %v311, 0.0
      %vm336 = vcmp.gt.f32.partialorder %v312, 0.0
      %vm337 = vcmp.gt.f32.partialorder %v313, 0.0
      %vm338 = vcmp.gt.f32.partialorder %v314, 0.0
      %vm339 = vcmp.gt.f32.partialorder %v315, 0.0
      %vm340 = vcmp.gt.f32.partialorder %v316, 0.0
      %vm341 = vcmp.gt.f32.partialorder %v317, 0.0
      %vm342 = vcmp.gt.f32.partialorder %v318, 0.0
      %v343 = vmul.f32 %v295, 0.1
      %v344 = vmul.f32 %v296, 0.1
      %v345 = vmul.f32 %v297, 0.1
      %v346 = vmul.f32 %v298, 0.1
      %v347 = vmul.f32 %v299, 0.1
      %v348 = vmul.f32 %v300, 0.1
      %v349 = vmul.f32 %v301, 0.1
      %v350 = vmul.f32 %v302, 0.1
      %v351 = vmul.f32 %v303, 0.1
      %v352 = vmul.f32 %v304, 0.1
      %v353 = vmul.f32 %v305, 0.1
      %v354 = vmul.f32 %v306, 0.1
      %v355 = vmul.f32 %v307, 0.1
      %v356 = vmul.f32 %v308, 0.1
      %v357 = vmul.f32 %v309, 0.1
      %v358 = vmul.f32 %v310, 0.1
      %v359 = vmul.f32 %v311, 0.1
      %v360 = vmul.f32 %v312, 0.1
      %v361 = vmul.f32 %v313, 0.1
      %v362 = vmul.f32 %v314, 0.1
      %v363 = vmul.f32 %v315, 0.1
      %v364 = vmul.f32 %v316, 0.1
      %v365 = vmul.f32 %v317, 0.1
      %v366 = vmul.f32 %v318, 0.1
      %v367 = vsel %vm319, %v295, %v343
      %v368 = vsel %vm320, %v296, %v344
      %v369 = vsel %vm321, %v297, %v345
      %v370 = vsel %vm322, %v298, %v346
      %v371 = vsel %vm323, %v299, %v347
      %v372 = vsel %vm324, %v300, %v348
      %v373 = vsel %vm325, %v301, %v349
      %v374 = vsel %vm326, %v302, %v350
      %v375 = vsel %vm327, %v303, %v351
      %v376 = vsel %vm328, %v304, %v352
      %v377 = vsel %vm329, %v305, %v353
      %v378 = vsel %vm330, %v306, %v354
      %v379 = vsel %vm331, %v307, %v355
      %v380 = vsel %vm332, %v308, %v356
      %v381 = vsel %vm333, %v309, %v357
      %v382 = vsel %vm334, %v310, %v358
      %v383 = vsel %vm335, %v311, %v359
      %v384 = vsel %vm336, %v312, %v360
      %v385 = vsel %vm337, %v313, %v361
      %v386 = vsel %vm338, %v314, %v362
      %v387 = vsel %vm339, %v315, %v363
      %v388 = vsel %vm340, %v316, %v364
      %v389 = vsel %vm341, %v317, %v365
      %v390 = vsel %vm342, %v318, %v366
      %vm391 = vcmask 64512
      %392 = vst.msk [vmem:[%s231] sm:$0xff] %vm391, %v367
      %393 = vst.msk [vmem:[%s231 + $0x8] sm:$0xff] %vm391, %v368
      %394 = vst.msk [vmem:[%s231 + $0x10] sm:$0xff] %vm391, %v369
      %395 = vst.msk [vmem:[%s231 + $0x18] sm:$0xff] %vm391, %v370
      %396 = vst.msk [vmem:[%s231 + $0x20] sm:$0xff] %vm391, %v371
      %397 = vst.msk [vmem:[%s231 + $0x28] sm:$0xff] %vm391, %v372
      %398 = vst.msk [vmem:[%s231 + $0x30] sm:$0xff] %vm391, %v373
      %399 = vst.msk [vmem:[%s231 + $0x38] sm:$0xff] %vm391, %v374
      %400 = vst.msk [vmem:[%s231 + $0x40] sm:$0xff] %vm391, %v375
      %401 = vst.msk [vmem:[%s231 + $0x48] sm:$0xff] %vm391, %v376
      %402 = vst.msk [vmem:[%s231 + $0x50] sm:$0xff] %vm391, %v377
      %403 = vst.msk [vmem:[%s231 + $0x58] sm:$0xff] %vm391, %v378
      %404 = vst.msk [vmem:[%s231 + $0x60] sm:$0xff] %vm391, %v379
      %405 = vst.msk [vmem:[%s231 + $0x68] sm:$0xff] %vm391, %v380
      %406 = vst.msk [vmem:[%s231 + $0x70] sm:$0xff] %vm391, %v381
      %407 = vst.msk [vmem:[%s231 + $0x78] sm:$0xff] %vm391, %v382
      %408 = vst.msk [vmem:[%s231 + $0x80] sm:$0xff] %vm391, %v383
      %409 = vst.msk [vmem:[%s231 + $0x88] sm:$0xff] %vm391, %v384
      %410 = vst.msk [vmem:[%s231 + $0x90] sm:$0xff] %vm391, %v385
      %411 = vst.msk [vmem:[%s231 + $0x98] sm:$0xff] %vm391, %v386
      %412 = vst.msk [vmem:[%s231 + $0xa0] sm:$0xff] %vm391, %v387
      %413 = vst.msk [vmem:[%s231 + $0xa8] sm:$0xff] %vm391, %v388
      %414 = vst.msk [vmem:[%s231 + $0xb0] sm:$0xff] %vm391, %v389
      %415 = vst.msk [vmem:[%s231 + $0xb8] sm:$0xff] %vm391, %v390
      %s416 = smul.u32 24, %s18
      %p417 = scmp.lt.s32.totalorder %s416, 71
      %s418 = scalar_select %p417, %s416, 71
      %p419 = scmp.lt.s32.totalorder %s19, 0
      %s420 = scalar_select %p419, %s19, 0
      %s421 = sadd.s32 %s420, %s418
      %s422 = smul.addr %s421, 8
      %s423 = scalar_lea.vmem %s3, %s422
      // Predicated region
      $region33: #{conv_bn_relu_pallas.3} parent=31 // pred_check
        %p424 = pneg %p126
      $region34: #{conv_bn_relu_pallas.3} parent=31 // pred_check_branch
        %426 = sbr.rel (%p424) target = $region36
      $region35: #{conv_bn_relu_pallas.3} parent=31 // pred_region
        %s427 = smul.u32 24, %s18
      $region36: #{conv_bn_relu_pallas.3} parent=31 // pred_fallthru
        _
    $region32: #{conv_bn_relu_pallas.3} parent=5 // pred_fallthru
      _
    %p428 = scmp.le.s32.totalorder 2, %s9
    // Predicated region
    $region37: #{conv_bn_relu_pallas.3} parent=5 // pred_check
      %p429 = pneg %p428
    $region38: #{conv_bn_relu_pallas.3} parent=5 // pred_check_branch
      %431 = sbr.rel (%p429) target = $region40
    $region39: #{conv_bn_relu_pallas.3} parent=5 // pred_region
      %s432 = ssub.s32 %s9, 2
      // Predicated region
      $region41: #{conv_bn_relu_pallas.3} parent=39 // pred_check
        %p433 = pneg %p132
      $region42: #{conv_bn_relu_pallas.3} parent=39 // pred_check_branch
        %435 = sbr.rel (%p433) target = $region44
      $region43: #{conv_bn_relu_pallas.3} parent=39 // pred_region
        %s436 = smul.u32 24, %s20
        %p437 = scmp.lt.s32.totalorder %s436, 71
        %s438 = scalar_select %p437, %s436, 71
        %p439 = scmp.lt.s32.totalorder %s21, 0
        %s440 = scalar_select %p439, %s21, 0
        %s441 = sadd.s32 %s440, %s438
        %s442 = smul.addr %s441, 8
        %s443 = scalar_lea.vmem %s3, %s442
      $region44: #{conv_bn_relu_pallas.3} parent=39 // pred_fallthru
        _
    $region40: #{conv_bn_relu_pallas.3} parent=5 // pred_fallthru
      _
  $region6: #{conv_bn_relu_pallas.3} parent=0 // loop_footer
    %s13 = sadd.s32 1, %s9
  $region7: #{conv_bn_relu_pallas.3} parent=0 // loop_footer_branch
    %8 = sbr.rel target = $region3
  $region8: #{conv_bn_relu_pallas.3} parent=0 // loop_exit
    _

// kernel: conv_bn_relu_pallas.2
$region0: #{conv_bn_relu_pallas.2}
  #allocation0 [shape = 'u32[]', space=smem, size = 0x4, offset = 0x4, fixed_abs, tag = 'smem constant byte address 0x4 - core index']
  #allocation1 [shape = 'u32[144,128]{1,0:T(1,128)}', space=vmem, size = 0x12000, scoped, tag = 'internal scratch']
  %s0 = inlined_call_operand.vmem [shape: bf16[576,36], index: 0, kind: input, shape index: {}]
  %s1 = inlined_call_operand.vmem [shape: bf16[36,8], index: 1, kind: input, shape index: {}]
  %s2 = inlined_call_operand.vmem [shape: f32[576,8], index: 2, kind: output, shape index: {0}]
  %s3 = inlined_call_operand.vmem [shape: f32[3,8,8], index: 3, kind: output, shape index: {1}]
  %s4 = inlined_call_operand.vmem [shape: f32[3,8,8], index: 4, kind: output, shape index: {2}]
  %5 = xla_tuple %s2, %s3, %s4
  %s6 = sld [smem:[#allocation0]]
  $region57: #{conv_bn_relu_pallas.2} parent=0
    _
  %s8 = ssub.s32 1, %s6
  %s9 = scalar_select 0, %s8, %s6
  loop: start=0, step=1, limit=5
  $region2: #{conv_bn_relu_pallas.2} parent=0 // loop_pre_header
    _
  $region3: #{conv_bn_relu_pallas.2} parent=0 // loop_header
    %s11 = sphi 0, %s15
    %p12 = scmp.ge.s32.totalorder %s11, 5
    %s18 = sphi 0, %s30
    %s19 = sphi 0, %s26
    %s20 = sphi 0, %s18
    %s21 = sphi 0, %s19
    %s22 = sphi 0, %s20
    %s23 = sphi 0, %s21
    %s33 = sphi 0, %s35
    %s36 = sphi 0, %s33
    %s37 = sphi 0, %s36
    %s53 = sphi 0, %s37
    %s59 = sphi 0, %s61
    %s62 = sphi 0, %s59
    %s63 = sphi 0, %s62
    %s79 = sphi 0, %s63
    %s87 = sphi 0, %s89
    %s90 = sphi 0, %s87
    %s91 = sphi 0, %s90
    %s107 = sphi 0, %s91
    %s115 = sphi 0, %s117
    %s118 = sphi 0, %s115
    %s119 = sphi 0, %s118
    %s135 = sphi 0, %s119
    %s143 = sphi 0, %s145
    %s146 = sphi 0, %s143
    %s147 = sphi 0, %s146
    %s163 = sphi 0, %s147
  $region4: #{conv_bn_relu_pallas.2} parent=0 // loop_header_branch
    %14 = sbr.rel (%p12) target = $region8
  $region5: #{conv_bn_relu_pallas.2} parent=0 // loop_body
    %s16 = ssub.s32 %s11, 1
    %s17 = ssub.s32 %s11, 2
    %s24 = sadd.s32 1, %s19
    %p25 = scmp.ge.s32.totalorder %s24, 1
    %s26 = scalar_select %p25, 0, %s24
    %s27 = sadd.s32 1, %s18
    %s28 = scalar_select %p25, %s27, %s18
    %p29 = scmp.ge.s32.totalorder %s28, 3
    %s30 = scalar_select %p29, 0, %s28
    %s31 = ssub.s32 %s18, %s30
    %p32 = scmp.eq.s32.totalorder %s31, 0
    %s34 = sadd.s32 %s33, 1
    %s35 = scalar_select %p32, %s33, %s34
    %p38 = pneg %p32
    %p39 = scmp.eq.s32.totalorder %s11, 2
    %p40 = por %p38, %p39
    %p41 = scmp.ne.s32.totalorder %s33, %s36
    %p42 = scmp.eq.s32.totalorder %s11, 0
    %p43 = por %p41, %p42
    %p44 = scmp.ne.s32.totalorder %s33, %s36
    %p45 = scmp.eq.s32.totalorder %s16, 2
    %p46 = por %p44, %p45
    %p47 = scmp.ne.s32.totalorder %s36, %s37
    %p48 = scmp.eq.s32.totalorder %s16, 0
    %p49 = por %p47, %p48
    %p50 = scmp.ne.s32.totalorder %s36, %s37
    %p51 = scmp.eq.s32.totalorder %s17, 2
    %p52 = por %p50, %p51
    %p54 = scmp.ne.s32.totalorder %s37, %s53
    %p55 = scmp.eq.s32.totalorder %s17, 0
    %p56 = por %p54, %p55
    %s57 = ssub.s32 %s19, %s26
    %p58 = scmp.eq.s32.totalorder %s57, 0
    %s60 = sadd.s32 %s59, 1
    %s61 = scalar_select %p58, %s59, %s60
    %p64 = pneg %p58
    %p65 = scmp.eq.s32.totalorder %s11, 2
    %p66 = por %p64, %p65
    %p67 = scmp.ne.s32.totalorder %s59, %s62
    %p68 = scmp.eq.s32.totalorder %s11, 0
    %p69 = por %p67, %p68
    %p70 = scmp.ne.s32.totalorder %s59, %s62
    %p71 = scmp.eq.s32.totalorder %s16, 2
    %p72 = por %p70, %p71
    %p73 = scmp.ne.s32.totalorder %s62, %s63
    %p74 = scmp.eq.s32.totalorder %s16, 0
    %p75 = por %p73, %p74
    %p76 = scmp.ne.s32.totalorder %s62, %s63
    %p77 = scmp.eq.s32.totalorder %s17, 2
    %p78 = por %p76, %p77
    %p80 = scmp.ne.s32.totalorder %s63, %s79
    %p81 = scmp.eq.s32.totalorder %s17, 0
    %p82 = por %p80, %p81
    %s83 = ssub.s32 %s18, %s30
    %s84 = ssub.s32 %s19, %s26
    %s85 = sor.u32 %s83, %s84
    %p86 = scmp.eq.s32.totalorder %s85, 0
    %s88 = sadd.s32 %s87, 1
    %s89 = scalar_select %p86, %s87, %s88
    %p92 = pneg %p86
    %p93 = scmp.eq.s32.totalorder %s11, 2
    %p94 = por %p92, %p93
    %p95 = scmp.ne.s32.totalorder %s87, %s90
    %p96 = scmp.eq.s32.totalorder %s11, 0
    %p97 = por %p95, %p96
    %p98 = scmp.ne.s32.totalorder %s87, %s90
    %p99 = scmp.eq.s32.totalorder %s16, 2
    %p100 = por %p98, %p99
    %p101 = scmp.ne.s32.totalorder %s90, %s91
    %p102 = scmp.eq.s32.totalorder %s16, 0
    %p103 = por %p101, %p102
    %p104 = scmp.ne.s32.totalorder %s90, %s91
    %p105 = scmp.eq.s32.totalorder %s17, 2
    %p106 = por %p104, %p105
    %p108 = scmp.ne.s32.totalorder %s91, %s107
    %p109 = scmp.eq.s32.totalorder %s17, 0
    %p110 = por %p108, %p109
    %s111 = ssub.s32 %s18, %s30
    %s112 = ssub.s32 %s19, %s26
    %s113 = sor.u32 %s111, %s112
    %p114 = scmp.eq.s32.totalorder %s113, 0
    %s116 = sadd.s32 %s115, 1
    %s117 = scalar_select %p114, %s115, %s116
    %p120 = pneg %p114
    %p121 = scmp.eq.s32.totalorder %s11, 2
    %p122 = por %p120, %p121
    %p123 = scmp.ne.s32.totalorder %s115, %s118
    %p124 = scmp.eq.s32.totalorder %s11, 0
    %p125 = por %p123, %p124
    %p126 = scmp.ne.s32.totalorder %s115, %s118
    %p127 = scmp.eq.s32.totalorder %s16, 2
    %p128 = por %p126, %p127
    %p129 = scmp.ne.s32.totalorder %s118, %s119
    %p130 = scmp.eq.s32.totalorder %s16, 0
    %p131 = por %p129, %p130
    %p132 = scmp.ne.s32.totalorder %s118, %s119
    %p133 = scmp.eq.s32.totalorder %s17, 2
    %p134 = por %p132, %p133
    %p136 = scmp.ne.s32.totalorder %s119, %s135
    %p137 = scmp.eq.s32.totalorder %s17, 0
    %p138 = por %p136, %p137
    %s139 = ssub.s32 %s18, %s30
    %s140 = ssub.s32 %s19, %s26
    %s141 = sor.u32 %s139, %s140
    %p142 = scmp.eq.s32.totalorder %s141, 0
    %s144 = sadd.s32 %s143, 1
    %s145 = scalar_select %p142, %s143, %s144
    %p148 = pneg %p142
    %p149 = scmp.eq.s32.totalorder %s11, 2
    %p150 = por %p148, %p149
    %p151 = scmp.ne.s32.totalorder %s143, %s146
    %p152 = scmp.eq.s32.totalorder %s11, 0
    %p153 = por %p151, %p152
    %p154 = scmp.ne.s32.totalorder %s143, %s146
    %p155 = scmp.eq.s32.totalorder %s16, 2
    %p156 = por %p154, %p155
    %p157 = scmp.ne.s32.totalorder %s146, %s147
    %p158 = scmp.eq.s32.totalorder %s16, 0
    %p159 = por %p157, %p158
    %p160 = scmp.ne.s32.totalorder %s146, %s147
    %p161 = scmp.eq.s32.totalorder %s17, 2
    %p162 = por %p160, %p161
    %p164 = scmp.ne.s32.totalorder %s147, %s163
    %p165 = scmp.eq.s32.totalorder %s17, 0
    %p166 = por %p164, %p165
    %p167 = scmp.le.s32.totalorder 1, %s11
    %p168 = scmp.lt.s32.totalorder %s11, 4
    %p169 = pnand %p167, %p168
    %p170 = pneg %p169
    // Predicated region
    $region9: #{conv_bn_relu_pallas.2} parent=5 // pred_check
      _
    $region10: #{conv_bn_relu_pallas.2} parent=5 // pred_check_branch
      %172 = sbr.rel (%p169) target = $region12
    $region11: #{conv_bn_relu_pallas.2} parent=5 // pred_region
      %s173 = ssub.s32 %s11, 1
      // Predicated region
      $region13: #{conv_bn_relu_pallas.2} parent=11 // pred_check
        %p174 = pneg %p75
      $region14: #{conv_bn_relu_pallas.2} parent=11 // pred_check_branch
        %176 = sbr.rel (%p174) target = $region16
      $region15: #{conv_bn_relu_pallas.2} parent=11 // pred_region
        %p177 = scmp.lt.s32.totalorder %s21, 0
        %s178 = scalar_select %p177, %s21, 0
        %s179 = smul.addr %s178, 4
        %s180 = scalar_lea.vmem %s1, %s179
      $region16: #{conv_bn_relu_pallas.2} parent=11 // pred_fallthru
        _
    $region12: #{conv_bn_relu_pallas.2} parent=5 // pred_fallthru
      _
    %p181 = scmp.lt.s32.totalorder %s11, 3
    // Predicated region
    $region17: #{conv_bn_relu_pallas.2} parent=5 // pred_check
      %p182 = pneg %p181
    $region18: #{conv_bn_relu_pallas.2} parent=5 // pred_check_branch
      %184 = sbr.rel (%p182) target = $region20
    $region19: #{conv_bn_relu_pallas.2} parent=5 // pred_region
      // Predicated region
      $region21: #{conv_bn_relu_pallas.2} parent=19 // pred_check
        %p185 = pneg %p43
      $region22: #{conv_bn_relu_pallas.2} parent=19 // pred_check_branch
        %187 = sbr.rel (%p185) target = $region24
      $region23: #{conv_bn_relu_pallas.2} parent=19 // pred_region
        %s188 = smul.u32 24, %s18
        %p189 = scmp.lt.s32.totalorder %s188, 71
        %s190 = scalar_select %p189, %s188, 71
        %s191 = smul.addr %s190, 4
        %s192 = scalar_lea.vmem %s0, %s191
        %s193 = smul.u32 24, %s18
      $region24: #{conv_bn_relu_pallas.2} parent=19 // pred_fallthru
        _
    $region20: #{conv_bn_relu_pallas.2} parent=5 // pred_fallthru
      _
    %p194 = scmp.le.s32.totalorder 1, %s11
    %p195 = scmp.lt.s32.totalorder %s11, 4
    %p196 = pnand %p194, %p195
    %p197 = pneg %p196
    // Predicated region
    $region25: #{conv_bn_relu_pallas.2} parent=5 // pred_check
      _
    $region26: #{conv_bn_relu_pallas.2} parent=5 // pred_check_branch
      %199 = sbr.rel (%p196) target = $region28
    $region27: #{conv_bn_relu_pallas.2} parent=5 // pred_region
      %s200 = ssub.s32 %s11, 1
      %s201 = smul.u32 24, %s20
      %p202 = scmp.lt.s32.totalorder %s201, 71
      %s203 = scalar_select %p202, %s201, 71
      %s204 = smul.addr %s203, 4
      %s205 = scalar_lea.vmem %s0, %s204
      %p206 = pneg %p49
      %p207 = pneg %p46
      %p208 = scmp.lt.s32.totalorder %s21, 0
      %s209 = scalar_select %p208, %s21, 0
      %s210 = smul.addr %s209, 4
      %s211 = scalar_lea.vmem %s1, %s210
      %p212 = pneg %p75
      %p213 = pneg %p72
      %p214 = pneg %p103
      %p215 = pneg %p100
      %s216 = smul.u32 24, %s20
      %p217 = scmp.lt.s32.totalorder %s216, 71
      %s218 = scalar_select %p217, %s216, 71
      %p219 = scmp.lt.s32.totalorder %s21, 0
      %s220 = scalar_select %p219, %s21, 0
      %s221 = sadd.s32 %s220, %s218
      %s222 = smul.addr %s221, 8
      %s223 = scalar_lea.vmem %s2, %s222
      %p224 = pneg %p131
      %p225 = pneg %p128
      %p226 = scmp.lt.s32.totalorder %s20, 2
      %s227 = scalar_select %p226, %s20, 2
      %p228 = scmp.lt.s32.totalorder %s21, 0
      %s229 = scalar_select %p228, %s21, 0
      %s230 = sadd.s32 %s229, %s227
      %s231 = smul.addr %s230, 8
      %s232 = scalar_lea.vmem %s3, %s231
      %p233 = pneg %p159
      %p234 = pneg %p156
      %p235 = scmp.lt.s32.totalorder %s20, 2
      %s236 = scalar_select %p235, %s20, 2
      %p237 = scmp.lt.s32.totalorder %s21, 0
      %s238 = scalar_select %p237, %s21, 0
      %s239 = sadd.s32 %s238, %s236
      %s240 = smul.addr %s239, 8
      %s241 = scalar_lea.vmem %s4, %s240
      %s242 = smul.u32 24, %s20
      %p243 = scmp.lt.s32.totalorder %s242, 71
      %s244 = scalar_select %p243, %s242, 71
      %s245 = smul.addr %s244, 4
      %s246 = scalar_lea.vmem %s0, %s245
      %s247 = smul.u32 24, %s20
      %p248 = scmp.lt.s32.totalorder %s21, 0
      %s249 = scalar_select %p248, %s21, 0
      %s250 = smul.addr %s249, 4
      %s251 = scalar_lea.vmem %s1, %s250
      %s252 = smul.u32 24, %s20
      %p253 = scmp.lt.s32.totalorder %s252, 71
      %s254 = scalar_select %p253, %s252, 71
      %p255 = scmp.lt.s32.totalorder %s21, 0
      %s256 = scalar_select %p255, %s21, 0
      %s257 = sadd.s32 %s256, %s254
      %s258 = smul.addr %s257, 8
      %s259 = scalar_lea.vmem %s2, %s258
      %s260 = smul.u32 24, %s20
      %p261 = scmp.lt.s32.totalorder %s20, 2
      %s262 = scalar_select %p261, %s20, 2
      %p263 = scmp.lt.s32.totalorder %s21, 0
      %s264 = scalar_select %p263, %s21, 0
      %s265 = sadd.s32 %s264, %s262
      %s266 = smul.addr %s265, 8
      %s267 = scalar_lea.vmem %s3, %s266
      %p268 = scmp.lt.s32.totalorder %s20, 2
      %s269 = scalar_select %p268, %s20, 2
      %p270 = scmp.lt.s32.totalorder %s21, 0
      %s271 = scalar_select %p270, %s21, 0
      %s272 = sadd.s32 %s271, %s269
      %s273 = smul.addr %s272, 8
      %s274 = scalar_lea.vmem %s4, %s273
      %v276 = vld [vmem:[%s246] sm:$0xf]
      %v277 = vld [vmem:[%s246 + $0x4] sm:$0xf]
      %v278 = vld [vmem:[%s246 + $0x8] sm:$0xf]
      %v279 = vld [vmem:[%s246 + $0xc] sm:$0xf]
      %v280 = vld [vmem:[%s246 + $0x10] sm:$0xf]
      %v281 = vld [vmem:[%s246 + $0x14] sm:$0xf]
      %v282 = vld [vmem:[%s246 + $0x18] sm:$0xf]
      %v283 = vld [vmem:[%s246 + $0x1c] sm:$0xf]
      %v284 = vld [vmem:[%s246 + $0x20] sm:$0xf]
      %v285 = vld [vmem:[%s246 + $0x24] sm:$0xf]
      %v286 = vld [vmem:[%s246 + $0x28] sm:$0xf]
      %v287 = vld [vmem:[%s246 + $0x2c] sm:$0xf]
      %v288 = vld [vmem:[%s246 + $0x30] sm:$0xf]
      %v289 = vld [vmem:[%s246 + $0x34] sm:$0xf]
      %v290 = vld [vmem:[%s246 + $0x38] sm:$0xf]
      %v291 = vld [vmem:[%s246 + $0x3c] sm:$0xf]
      %v292 = vld [vmem:[%s246 + $0x40] sm:$0xf]
      %v293 = vld [vmem:[%s246 + $0x44] sm:$0xf]
      %v294 = vld [vmem:[%s246 + $0x48] sm:$0xf]
      %v295 = vld [vmem:[%s246 + $0x4c] sm:$0xf]
      %v296 = vld [vmem:[%s246 + $0x50] sm:$0xf]
      %v297 = vld [vmem:[%s246 + $0x54] sm:$0xf]
      %v298 = vld [vmem:[%s246 + $0x58] sm:$0xf]
      %v299 = vld [vmem:[%s246 + $0x5c] sm:$0xf]
      %v300 = vld [vmem:[%s251] sm:$0xf]
      %v301 = vld [vmem:[%s251 + $0x4] sm:$0xf]
      %v302 = vld [vmem:[%s251 + $0x8] sm:$0xf]
      %v303 = vld [vmem:[%s251 + $0xc] sm:$0xf]
      %v304 = vld [vmem:[%s251 + $0x10] sm:$0x3]
      %v329 = vunpack.c.l.b16 %v276
      %v330 = vunpack.c.l.b16 %v277
      %v331 = vunpack.c.l.b16 %v278
      %v332 = vunpack.c.l.b16 %v279
      %v333 = vunpack.c.l.b16 %v280
      %v334 = vunpack.c.l.b16 %v281
      %v335 = vunpack.c.l.b16 %v282
      %v336 = vunpack.c.l.b16 %v283
      %v337 = vunpack.c.l.b16 %v284
      %v338 = vunpack.c.l.b16 %v285
      %v339 = vunpack.c.l.b16 %v286
      %v340 = vunpack.c.l.b16 %v287
      %v341 = vunpack.c.l.b16 %v288
      %v342 = vunpack.c.l.b16 %v289
      %v343 = vunpack.c.l.b16 %v290
      %v344 = vunpack.c.l.b16 %v291
      %v345 = vunpack.c.l.b16 %v292
      %v346 = vunpack.c.l.b16 %v293
      %v347 = vunpack.c.l.b16 %v294
      %v348 = vunpack.c.l.b16 %v295
      %v349 = vunpack.c.l.b16 %v296
      %v350 = vunpack.c.l.b16 %v297
      %v351 = vunpack.c.l.b16 %v298
      %v352 = vunpack.c.l.b16 %v299
      %v353 = vpack.c.b16 %v330, %v329
      %v354 = vpack.c.b16 %v332, %v331
      %v355 = vpack.c.b16 %v334, %v333
      %v356 = vpack.c.b16 %v336, %v335
      %v357 = vpack.c.b16 %v338, %v337
      %v358 = vpack.c.b16 %v340, %v339
      %v359 = vpack.c.b16 %v342, %v341
      %v360 = vpack.c.b16 %v344, %v343
      %v361 = vpack.c.b16 %v346, %v345
      %v362 = vpack.c.b16 %v348, %v347
      %v363 = vpack.c.b16 %v350, %v349
      %v364 = vpack.c.b16 %v352, %v351
      %v370 = vunpack.c.l.b16 %v300
      %v371 = vunpack.c.l.b16 %v301
      %v372 = vunpack.c.l.b16 %v302
      %v373 = vunpack.c.l.b16 %v303
      %v374 = vunpack.c.l.b16 %v304
      %v375 = vpack.c.b16 %v371, %v370
      %v376 = vpack.c.b16 %v373, %v372
      %v377 = vpack.c.b16 %v374, %v374
      %vm380 = vcmask 293888
      %v382 = vsel %vm380, %v353, 0
      %v385 = vsel %vm380, %v354, 0
      %v388 = vsel %vm380, %v355, 0
      %v391 = vsel %vm380, %v356, 0
      %v394 = vsel %vm380, %v357, 0
      %v397 = vsel %vm380, %v358, 0
      %v400 = vsel %vm380, %v359, 0
      %v403 = vsel %vm380, %v360, 0
      %v406 = vsel %vm380, %v361, 0
      %v409 = vsel %vm380, %v362, 0
      %v412 = vsel %vm380, %v363, 0
      %v415 = vsel %vm380, %v364, 0
      %vm417 = vcmask 1041408
      %v419 = vsel %vm417, %v377, 0
      %421 = vmatprep.subr.bf16.mxu0 0
      %422 = vmatpush1.bf16.msra.mxu0 0
      %423 = vmatprep.subr.bf16.mxu0 0
      %424 = vmatpush1.bf16.msra.mxu0 0
      %425 = vmatprep.subr.bf16.mxu0 0
      %426 = vmatpush1.bf16.msra.mxu0 0
      %427 = vmatprep.subr.bf16.mxu0 0
      %428 = vmatpush1.bf16.msra.mxu0 0
      %429 = vmatprep.subr.bf16.mxu0 0
      %430 = vmatpush1.bf16.msra.mxu0 0
      %431 = vmatprep.subr.bf16.mxu0 0
      %432 = vmatpush1.bf16.msra.mxu0 %v419
      %433 = vmatprep.subr.bf16.mxu0 0
      %434 = vmatpush1.bf16.msra.mxu0 %v376
      %435 = vmatprep.subr.bf16.mxu0 0
      %436 = vmatpush1.bf16.msra.mxu0 %v375
      %437 = vmatprep.subr.bf16.mxu0 0
      %438 = vmatpush2.bf16.msra.mxu0 0
      %439 = vmatprep.subr.bf16.mxu0 0
      %440 = vmatpush2.bf16.msra.mxu0 0
      %441 = vmatprep.subr.bf16.mxu0 0
      %442 = vmatpush2.bf16.msra.mxu0 0
      %443 = vmatprep.subr.bf16.mxu0 0
      %444 = vmatpush2.bf16.msra.mxu0 0
      %445 = vmatprep.subr.bf16.mxu0 0
      %446 = vmatpush2.bf16.msra.mxu0 0
      %447 = vmatprep.subr.bf16.mxu0 0
      %448 = vmatpush2.bf16.msra.mxu0 0
      %449 = vmatprep.subr.bf16.mxu0 0
      %450 = vmatpush2.bf16.msra.mxu0 0
      %451 = vmatprep.subr.bf16.mxu0 0
      %452 = vmatpush2.bf16.msra.mxu0 0
      %453 = vmatprep.mubr.bf16.mxu0 0
      %454 = vmatmul.mubr.bf16.gmra.mxu0 %v382
      %v455 = vpop.f32.mrf.mxu0
      %v456 = vadd.f32 0.0, %v455
      %v457 = vpop.f32.mrf.mxu0
      %v458 = vpop.f32.mrf.mxu0
      %v459 = vadd.f32 0.0, %v458
      %v460 = vpop.f32.mrf.mxu0
      %461 = vmatprep.mubr.bf16.mxu0 0
      %462 = vmatmul.mubr.bf16.gmra.mxu0 %v385
      %v463 = vpop.f32.mrf.mxu0
      %v464 = vadd.f32 0.0, %v463
      %v465 = vpop.f32.mrf.mxu0
      %v466 = vpop.f32.mrf.mxu0
      %v467 = vadd.f32 0.0, %v466
      %v468 = vpop.f32.mrf.mxu0
      %469 = vmatprep.mubr.bf16.mxu0 0
      %470 = vmatmul.mubr.bf16.gmra.mxu0 %v388
      %v471 = vpop.f32.mrf.mxu0
      %v472 = vadd.f32 0.0, %v471
      %v473 = vpop.f32.mrf.mxu0
      %v474 = vpop.f32.mrf.mxu0
      %v475 = vadd.f32 0.0, %v474
      %v476 = vpop.f32.mrf.mxu0
      %477 = vmatprep.mubr.bf16.mxu0 0
      %478 = vmatmul.mubr.bf16.gmra.mxu0 %v391
      %v479 = vpop.f32.mrf.mxu0
      %v480 = vadd.f32 0.0, %v479
      %v481 = vpop.f32.mrf.mxu0
      %v482 = vpop.f32.mrf.mxu0
      %v483 = vadd.f32 0.0, %v482
      %v484 = vpop.f32.mrf.mxu0
      %485 = vmatprep.mubr.bf16.mxu0 0
      %486 = vmatmul.mubr.bf16.gmra.mxu0 %v394
      %v487 = vpop.f32.mrf.mxu0
      %v488 = vadd.f32 0.0, %v487
      %v489 = vpop.f32.mrf.mxu0
      %v490 = vpop.f32.mrf.mxu0
      %v491 = vadd.f32 0.0, %v490
      %v492 = vpop.f32.mrf.mxu0
      %493 = vmatprep.mubr.bf16.mxu0 0
      %494 = vmatmul.mubr.bf16.gmra.mxu0 %v397
      %v495 = vpop.f32.mrf.mxu0
      %v496 = vadd.f32 0.0, %v495
      %v497 = vpop.f32.mrf.mxu0
      %v498 = vpop.f32.mrf.mxu0
      %v499 = vadd.f32 0.0, %v498
      %v500 = vpop.f32.mrf.mxu0
      %501 = vmatprep.mubr.bf16.mxu0 0
      %502 = vmatmul.mubr.bf16.gmra.mxu0 %v400
      %v503 = vpop.f32.mrf.mxu0
      %v504 = vadd.f32 0.0, %v503
      %v505 = vpop.f32.mrf.mxu0
      %v506 = vpop.f32.mrf.mxu0
      %v507 = vadd.f32 0.0, %v506
      %v508 = vpop.f32.mrf.mxu0
      %509 = vmatprep.mubr.bf16.mxu0 0
      %510 = vmatmul.mubr.bf16.gmra.mxu0 %v403
      %v511 = vpop.f32.mrf.mxu0
      %v512 = vadd.f32 0.0, %v511
      %v513 = vpop.f32.mrf.mxu0
      %v514 = vpop.f32.mrf.mxu0
      %v515 = vadd.f32 0.0, %v514
      %v516 = vpop.f32.mrf.mxu0
      %517 = vmatprep.mubr.bf16.mxu0 0
      %518 = vmatmul.mubr.bf16.gmra.mxu0 %v406
      %v519 = vpop.f32.mrf.mxu0
      %v520 = vadd.f32 0.0, %v519
      %v521 = vpop.f32.mrf.mxu0
      %v522 = vpop.f32.mrf.mxu0
      %v523 = vadd.f32 0.0, %v522
      %v524 = vpop.f32.mrf.mxu0
      %525 = vmatprep.mubr.bf16.mxu0 0
      %526 = vmatmul.mubr.bf16.gmra.mxu0 %v409
      %v527 = vpop.f32.mrf.mxu0
      %v528 = vadd.f32 0.0, %v527
      %v529 = vpop.f32.mrf.mxu0
      %v530 = vpop.f32.mrf.mxu0
      %v531 = vadd.f32 0.0, %v530
      %v532 = vpop.f32.mrf.mxu0
      %533 = vmatprep.mubr.bf16.mxu0 0
      %534 = vmatmul.mubr.bf16.gmra.mxu0 %v412
      %v535 = vpop.f32.mrf.mxu0
      %v536 = vadd.f32 0.0, %v535
      %v537 = vpop.f32.mrf.mxu0
      %v538 = vpop.f32.mrf.mxu0
      %v539 = vadd.f32 0.0, %v538
      %v540 = vpop.f32.mrf.mxu0
      %541 = vmatprep.mubr.bf16.mxu0 0
      %542 = vmatmul.mubr.bf16.gmra.mxu0 %v415
      %v543 = vpop.f32.mrf.mxu0
      %v544 = vadd.f32 0.0, %v543
      %v545 = vpop.f32.mrf.mxu0
      %v546 = vpop.f32.mrf.mxu0
      %v547 = vadd.f32 0.0, %v546
      %v548 = vpop.f32.mrf.mxu0
      %549 = vdwg.mxu0
      %vm550 = vcmask 64512
      %551 = vst.msk [vmem:[%s259] sm:$0xff] %vm550, %v456
      %552 = vst.msk [vmem:[%s259 + $0x8] sm:$0xff] %vm550, %v459
      %553 = vst.msk [vmem:[%s259 + $0x10] sm:$0xff] %vm550, %v464
      %554 = vst.msk [vmem:[%s259 + $0x18] sm:$0xff] %vm550, %v467
      %555 = vst.msk [vmem:[%s259 + $0x20] sm:$0xff] %vm550, %v472
      %556 = vst.msk [vmem:[%s259 + $0x28] sm:$0xff] %vm550, %v475
      %557 = vst.msk [vmem:[%s259 + $0x30] sm:$0xff] %vm550, %v480
      %558 = vst.msk [vmem:[%s259 + $0x38] sm:$0xff] %vm550, %v483
      %559 = vst.msk [vmem:[%s259 + $0x40] sm:$0xff] %vm550, %v488
      %560 = vst.msk [vmem:[%s259 + $0x48] sm:$0xff] %vm550, %v491
      %561 = vst.msk [vmem:[%s259 + $0x50] sm:$0xff] %vm550, %v496
      %562 = vst.msk [vmem:[%s259 + $0x58] sm:$0xff] %vm550, %v499
      %563 = vst.msk [vmem:[%s259 + $0x60] sm:$0xff] %vm550, %v504
      %564 = vst.msk [vmem:[%s259 + $0x68] sm:$0xff] %vm550, %v507
      %565 = vst.msk [vmem:[%s259 + $0x70] sm:$0xff] %vm550, %v512
      %566 = vst.msk [vmem:[%s259 + $0x78] sm:$0xff] %vm550, %v515
      %567 = vst.msk [vmem:[%s259 + $0x80] sm:$0xff] %vm550, %v520
      %568 = vst.msk [vmem:[%s259 + $0x88] sm:$0xff] %vm550, %v523
      %569 = vst.msk [vmem:[%s259 + $0x90] sm:$0xff] %vm550, %v528
      %570 = vst.msk [vmem:[%s259 + $0x98] sm:$0xff] %vm550, %v531
      %571 = vst.msk [vmem:[%s259 + $0xa0] sm:$0xff] %vm550, %v536
      %572 = vst.msk [vmem:[%s259 + $0xa8] sm:$0xff] %vm550, %v539
      %573 = vst.msk [vmem:[%s259 + $0xb0] sm:$0xff] %vm550, %v544
      %574 = vst.msk [vmem:[%s259 + $0xb8] sm:$0xff] %vm550, %v547
      %v575 = vsel %vm550, %v456, 0.0
      %v576 = vsel %vm550, %v459, 0.0
      %v577 = vadd.f32 %v575, %v576
      %v578 = vsel %vm550, %v464, 0.0
      %v579 = vadd.f32 %v577, %v578
      %v580 = vsel %vm550, %v467, 0.0
      %v581 = vadd.f32 %v579, %v580
      %v582 = vsel %vm550, %v472, 0.0
      %v583 = vadd.f32 %v581, %v582
      %v584 = vsel %vm550, %v475, 0.0
      %v585 = vadd.f32 %v583, %v584
      %v586 = vsel %vm550, %v480, 0.0
      %v587 = vadd.f32 %v585, %v586
      %v588 = vsel %vm550, %v483, 0.0
      %v589 = vadd.f32 %v587, %v588
      %v590 = vsel %vm550, %v488, 0.0
      %v591 = vadd.f32 %v589, %v590
      %v592 = vsel %vm550, %v491, 0.0
      %v593 = vadd.f32 %v591, %v592
      %v594 = vsel %vm550, %v496, 0.0
      %v595 = vadd.f32 %v593, %v594
      %v596 = vsel %vm550, %v499, 0.0
      %v597 = vadd.f32 %v595, %v596
      %v598 = vsel %vm550, %v504, 0.0
      %v599 = vadd.f32 %v597, %v598
      %v600 = vsel %vm550, %v507, 0.0
      %v601 = vadd.f32 %v599, %v600
      %v602 = vsel %vm550, %v512, 0.0
      %v603 = vadd.f32 %v601, %v602
      %v604 = vsel %vm550, %v515, 0.0
      %v605 = vadd.f32 %v603, %v604
      %v606 = vsel %vm550, %v520, 0.0
      %v607 = vadd.f32 %v605, %v606
      %v608 = vsel %vm550, %v523, 0.0
      %v609 = vadd.f32 %v607, %v608
      %v610 = vsel %vm550, %v528, 0.0
      %v611 = vadd.f32 %v609, %v610
      %v612 = vsel %vm550, %v531, 0.0
      %v613 = vadd.f32 %v611, %v612
      %v614 = vsel %vm550, %v536, 0.0
      %v615 = vadd.f32 %v613, %v614
      %v616 = vsel %vm550, %v539, 0.0
      %v617 = vadd.f32 %v615, %v616
      %v618 = vsel %vm550, %v544, 0.0
      %v619 = vadd.f32 %v617, %v618
      %v620 = vsel %vm550, %v547, 0.0
      %v621 = vadd.f32 %v619, %v620
      %v622 = vrot.slane %v621, 4
      %v623 = vadd.f32 %v621, %v622
      %v624 = vrot.slane %v623, 2
      %v625 = vadd.f32 %v623, %v624
      %v626 = vrot.slane %v625, 1
      %v627 = vadd.f32 %v625, %v626
      %v628 = vmul.f32 %v456, %v456
      %v629 = vmul.f32 %v459, %v459
      %v630 = vmul.f32 %v464, %v464
      %v631 = vmul.f32 %v467, %v467
      %v632 = vmul.f32 %v472, %v472
      %v633 = vmul.f32 %v475, %v475
      %v634 = vmul.f32 %v480, %v480
      %v635 = vmul.f32 %v483, %v483
      %v636 = vmul.f32 %v488, %v488
      %v637 = vmul.f32 %v491, %v491
      %v638 = vmul.f32 %v496, %v496
      %v639 = vmul.f32 %v499, %v499
      %v640 = vmul.f32 %v504, %v504
      %v641 = vmul.f32 %v507, %v507
      %v642 = vmul.f32 %v512, %v512
      %v643 = vmul.f32 %v515, %v515
      %v644 = vmul.f32 %v520, %v520
      %v645 = vmul.f32 %v523, %v523
      %v646 = vmul.f32 %v528, %v528
      %v647 = vmul.f32 %v531, %v531
      %v648 = vmul.f32 %v536, %v536
      %v649 = vmul.f32 %v539, %v539
      %v650 = vmul.f32 %v544, %v544
      %v651 = vmul.f32 %v547, %v547
      %v652 = vsel %vm550, %v628, 0.0
      %v653 = vsel %vm550, %v629, 0.0
      %v654 = vadd.f32 %v652, %v653
      %v655 = vsel %vm550, %v630, 0.0
      %v656 = vadd.f32 %v654, %v655
      %v657 = vsel %vm550, %v631, 0.0
      %v658 = vadd.f32 %v656, %v657
      %v659 = vsel %vm550, %v632, 0.0
      %v660 = vadd.f32 %v658, %v659
      %v661 = vsel %vm550, %v633, 0.0
      %v662 = vadd.f32 %v660, %v661
      %v663 = vsel %vm550, %v634, 0.0
      %v664 = vadd.f32 %v662, %v663
      %v665 = vsel %vm550, %v635, 0.0
      %v666 = vadd.f32 %v664, %v665
      %v667 = vsel %vm550, %v636, 0.0
      %v668 = vadd.f32 %v666, %v667
      %v669 = vsel %vm550, %v637, 0.0
      %v670 = vadd.f32 %v668, %v669
      %v671 = vsel %vm550, %v638, 0.0
      %v672 = vadd.f32 %v670, %v671
      %v673 = vsel %vm550, %v639, 0.0
      %v674 = vadd.f32 %v672, %v673
      %v675 = vsel %vm550, %v640, 0.0
      %v676 = vadd.f32 %v674, %v675
      %v677 = vsel %vm550, %v641, 0.0
      %v678 = vadd.f32 %v676, %v677
      %v679 = vsel %vm550, %v642, 0.0
      %v680 = vadd.f32 %v678, %v679
      %v681 = vsel %vm550, %v643, 0.0
      %v682 = vadd.f32 %v680, %v681
      %v683 = vsel %vm550, %v644, 0.0
      %v684 = vadd.f32 %v682, %v683
      %v685 = vsel %vm550, %v645, 0.0
      %v686 = vadd.f32 %v684, %v685
      %v687 = vsel %vm550, %v646, 0.0
      %v688 = vadd.f32 %v686, %v687
      %v689 = vsel %vm550, %v647, 0.0
      %v690 = vadd.f32 %v688, %v689
      %v691 = vsel %vm550, %v648, 0.0
      %v692 = vadd.f32 %v690, %v691
      %v693 = vsel %vm550, %v649, 0.0
      %v694 = vadd.f32 %v692, %v693
      %v695 = vsel %vm550, %v650, 0.0
      %v696 = vadd.f32 %v694, %v695
      %v697 = vsel %vm550, %v651, 0.0
      %v698 = vadd.f32 %v696, %v697
      %v699 = vrot.slane %v698, 4
      %v700 = vadd.f32 %v698, %v699
      %v701 = vrot.slane %v700, 2
      %v702 = vadd.f32 %v700, %v701
      %v703 = vrot.slane %v702, 1
      %v704 = vadd.f32 %v702, %v703
      %705 = vst.msk [vmem:[%s267] sm:$0xff] %vm550, %v627
      %706 = vst.msk [vmem:[%s274] sm:$0xff] %vm550, %v704
      %s707 = smul.u32 24, %s20
      %p708 = scmp.lt.s32.totalorder %s707, 71
      %s709 = scalar_select %p708, %s707, 71
      %p710 = scmp.lt.s32.totalorder %s21, 0
      %s711 = scalar_select %p710, %s21, 0
      %s712 = sadd.s32 %s711, %s709
      %s713 = smul.addr %s712, 8
      %s714 = scalar_lea.vmem %s2, %s713
      %p715 = scmp.lt.s32.totalorder %s20, 2
      %s716 = scalar_select %p715, %s20, 2
      %p717 = scmp.lt.s32.totalorder %s21, 0
      %s718 = scalar_select %p717, %s21, 0
      %s719 = sadd.s32 %s718, %s716
      %s720 = smul.addr %s719, 8
      %s721 = scalar_lea.vmem %s3, %s720
      %p722 = scmp.lt.s32.totalorder %s20, 2
      %s723 = scalar_select %p722, %s20, 2
      %p724 = scmp.lt.s32.totalorder %s21, 0
      %s725 = scalar_select %p724, %s21, 0
      %s726 = sadd.s32 %s725, %s723
      %s727 = smul.addr %s726, 8
      %s728 = scalar_lea.vmem %s4, %s727
      // Predicated region
      $region29: #{conv_bn_relu_pallas.2} parent=27 // pred_check
        %p729 = pneg %p100
      $region30: #{conv_bn_relu_pallas.2} parent=27 // pred_check_branch
        %731 = sbr.rel (%p729) target = $region32
      $region31: #{conv_bn_relu_pallas.2} parent=27 // pred_region
        %s732 = smul.u32 24, %s20
      $region32: #{conv_bn_relu_pallas.2} parent=27 // pred_fallthru
        _
      // Predicated region
      $region33: #{conv_bn_relu_pallas.2} parent=27 // pred_check
        %p733 = pneg %p128
      $region34: #{conv_bn_relu_pallas.2} parent=27 // pred_check_branch
        %735 = sbr.rel (%p733) target = $region36
      $region35: #{conv_bn_relu_pallas.2} parent=27 // pred_region
        _
      $region36: #{conv_bn_relu_pallas.2} parent=27 // pred_fallthru
        _
      // Predicated region
      $region37: #{conv_bn_relu_pallas.2} parent=27 // pred_check
        %p736 = pneg %p156
      $region38: #{conv_bn_relu_pallas.2} parent=27 // pred_check_branch
        %738 = sbr.rel (%p736) target = $region40
      $region39: #{conv_bn_relu_pallas.2} parent=27 // pred_region
        _
      $region40: #{conv_bn_relu_pallas.2} parent=27 // pred_fallthru
        _
    $region28: #{conv_bn_relu_pallas.2} parent=5 // pred_fallthru
      _
    %p739 = scmp.le.s32.totalorder 2, %s11
    // Predicated region
    $region41: #{conv_bn_relu_pallas.2} parent=5 // pred_check
      %p740 = pneg %p739
    $region42: #{conv_bn_relu_pallas.2} parent=5 // pred_check_branch
      %742 = sbr.rel (%p740) target = $region44
    $region43: #{conv_bn_relu_pallas.2} parent=5 // pred_region
      %s743 = ssub.s32 %s11, 2
      // Predicated region
      $region45: #{conv_bn_relu_pallas.2} parent=43 // pred_check
        %p744 = pneg %p106
      $region46: #{conv_bn_relu_pallas.2} parent=43 // pred_check_branch
        %746 = sbr.rel (%p744) target = $region48
      $region47: #{conv_bn_relu_pallas.2} parent=43 // pred_region
        %s747 = smul.u32 24, %s22
        %p748 = scmp.lt.s32.totalorder %s747, 71
        %s749 = scalar_select %p748, %s747, 71
        %p750 = scmp.lt.s32.totalorder %s23, 0
        %s751 = scalar_select %p750, %s23, 0
        %s752 = sadd.s32 %s751, %s749
        %s753 = smul.addr %s752, 8
        %s754 = scalar_lea.vmem %s2, %s753
      $region48: #{conv_bn_relu_pallas.2} parent=43 // pred_fallthru
        _
      // Predicated region
      $region49: #{conv_bn_relu_pallas.2} parent=43 // pred_check
        %p755 = pneg %p134
      $region50: #{conv_bn_relu_pallas.2} parent=43 // pred_check_branch
        %757 = sbr.rel (%p755) target = $region52
      $region51: #{conv_bn_relu_pallas.2} parent=43 // pred_region
        %p758 = scmp.lt.s32.totalorder %s22, 2
        %s759 = scalar_select %p758, %s22, 2
        %p760 = scmp.lt.s32.totalorder %s23, 0
        %s761 = scalar_select %p760, %s23, 0
        %s762 = sadd.s32 %s761, %s759
        %s763 = smul.addr %s762, 8
        %s764 = scalar_lea.vmem %s3, %s763
      $region52: #{conv_bn_relu_pallas.2} parent=43 // pred_fallthru
        _
      // Predicated region
      $region53: #{conv_bn_relu_pallas.2} parent=43 // pred_check
        %p765 = pneg %p162
      $region54: #{conv_bn_relu_pallas.2} parent=43 // pred_check_branch
        %767 = sbr.rel (%p765) target = $region56
      $region55: #{conv_bn_relu_pallas.2} parent=43 // pred_region
        %p768 = scmp.lt.s32.totalorder %s22, 2
        %s769 = scalar_select %p768, %s22, 2
        %p770 = scmp.lt.s32.totalorder %s23, 0
        %s771 = scalar_select %p770, %s23, 0
        %s772 = sadd.s32 %s771, %s769
        %s773 = smul.addr %s772, 8
        %s774 = scalar_lea.vmem %s4, %s773
      $region56: #{conv_bn_relu_pallas.2} parent=43 // pred_fallthru
        _
    $region44: #{conv_bn_relu_pallas.2} parent=5 // pred_fallthru
      _
  $region6: #{conv_bn_relu_pallas.2} parent=0 // loop_footer
    %s15 = sadd.s32 1, %s11
  $region7: #{conv_bn_relu_pallas.2} parent=0 // loop_footer_branch
    %10 = sbr.rel target = $region3
  $region8: #{conv_bn_relu_pallas.2} parent=0 // loop_exit
    _

</llo_original>
